<compile_context>
chip_gen: v7x
topology: tpu7x:2x2x1
jax: 0.10.0
libtpu: 0.0.40
codegen_flags: <defaults>
</compile_context>

<pallas_src>
import functools

import jax
import jax.numpy as jnp
from jax import lax
from jax.experimental import pallas as pl
from jax.experimental.pallas import tpu as pltpu  # noqa: F401  (TPU backend)


# --------------------------------------------------------------------------- #
# Kernel 1: sample-invariant preparation (runs once per parameter set).
# --------------------------------------------------------------------------- #
def _prepare_kernel(dist_ref, prm_ref, spat_ref, tw_ref, *, otu_k, time_k):
    """Spatial OTU weights and time-window weights (detector-major rows)."""
    kap2 = prm_ref[:, 0:1] ** 2                       # (DR, 1)  kappa^2
    mu = prm_ref[:, 1:2]                              # (DR, 1)
    half = (prm_ref[:, 2:3] ** 2) * 0.5               # (DR, 1)  sigma^2 / 2

    # SpatialAgg: heaviside-logistic OTU weights, normalized (sum clamped >= 1).
    unnorm = jax.nn.sigmoid(2.0 * otu_k * (kap2 - dist_ref[...]))          # (DR, J)
    spat_ref[...] = unnorm / jnp.maximum(
        jnp.sum(unnorm, axis=-1, keepdims=True), 1.0)

    # TimeAgg: unit-boxcar window weights over time points, normalized.
    DR, T = tw_ref.shape
    t_idx = lax.broadcasted_iota(jnp.int32, (DR, T), 1).astype(jnp.float32)
    dt = t_idx - mu
    twu = (jax.nn.sigmoid(2.0 * time_k * (dt + half))
           - jax.nn.sigmoid(2.0 * time_k * (dt - half)))                   # (DR, T)
    tw_ref[...] = twu / jnp.maximum(jnp.sum(twu, axis=-1, keepdims=True), 1.0)


# --------------------------------------------------------------------------- #
# Kernel 2: per-batch forward (aggregate -> threshold -> AND -> classifier).
# --------------------------------------------------------------------------- #
def _apply_kernel(x_ref, spat_ref, tw_ref, sel_ref, det_ref, rule_ref, out_ref,
                  *, R, D, S, thresh_k):
    T = tw_ref.shape[1]

    # One batched MXU matmul over ALL samples: (DR, J) @ (J, S*T).
    agg = jnp.dot(spat_ref[...], x_ref[...],
                  preferred_element_type=jnp.float32)                      # (DR, S*T)

    # Time-weighted per-sample sum: tile tw along lanes once (concat of S
    # copies), one VPU multiply, then one MXU matmul against the block-diagonal
    # ones selector.  Replaces the S-unrolled slice/XLU-reduce/concat chain.
    tw_tiled = jnp.concatenate([tw_ref[...]] * S, axis=-1)                 # (DR, S*T)
    x_abun = jnp.dot(agg * tw_tiled, sel_ref[...],
                     preferred_element_type=jnp.float32)                   # (DR, S)

    # Threshold gate (packed detector slab: lanes = [thresh^2, z]).
    thr2 = det_ref[:, 0:1]                                                 # (DR, 1)
    z = det_ref[:, 1:2]                                                    # (DR, 1)
    x_above = jax.nn.sigmoid(2.0 * thresh_k * (x_abun - thr2))             # (DR, S)

    # Rules: soft logical AND over detectors.  Rows are detector-major
    # (row = d*R + r), so each detector is a contiguous leading-axis block and
    # the exact log-depth tree product multiplies full (R, S) blocks (VPU).
    # (reduce_prod has no reliable Mosaic lowering, hence the explicit tree.)
    term = 1.0 - z * (1.0 - x_above)                                       # (DR, S)
    factors = [term[d * R:(d + 1) * R, :] for d in range(D)]               # D x (R, S)
    while len(factors) > 1:
        nxt = [a * b for a, b in zip(factors[0::2], factors[1::2])]
        if len(factors) % 2:
            nxt.append(factors[-1])
        factors = nxt
    resp = factors[0]                                                      # (R, S)

    # Gated linear classifier (packed class slab: [w_eff | bias]).
    w_eff = rule_ref[:, 0:R]                                               # (2, R)
    bias = rule_ref[:, R:R + 1]                                            # (2, 1)
    out_ref[...] = (jnp.dot(w_eff, resp, preferred_element_type=jnp.float32)
                    + bias)                                                # (2, S)


# --------------------------------------------------------------------------- #
# Host wrappers.
# --------------------------------------------------------------------------- #
def _flatten_dmajor(p):
    """(R, D) -> (D*R,) with flat row index d*R + r (detector-major)."""
    return p.T.reshape(-1)


def mditre_prepare(dist, kappa, mu, sigma, num_time, otu_k=1.0, time_k=1.0):
    """Sample-invariant spat / time weights. Cacheable across batches in eval."""
    R, D, J = dist.shape
    DR = R * D
    dist_flat = jnp.transpose(dist, (1, 0, 2)).reshape(DR, J)              # D-major
    prm = jnp.stack([_flatten_dmajor(kappa), _flatten_dmajor(mu),
                     _flatten_dmajor(sigma)], axis=-1)                     # (DR, 3)
    kernel = functools.partial(_prepare_kernel, otu_k=otu_k, time_k=time_k)
    spat_flat, tw_flat = pl.pallas_call(
        kernel,
        out_shape=(jax.ShapeDtypeStruct((DR, J), jnp.float32),
                   jax.ShapeDtypeStruct((DR, num_time), jnp.float32)),
    )(dist_flat, prm)
    return spat_flat, tw_flat


def mditre_forward(x, dist, kappa, mu, sigma, thresh, alpha, beta, weight, bias,
                   otu_k=1.0, time_k=1.0, thresh_k=1.0, bc_k=1.0):
    S, J, T = x.shape
    R, D = kappa.shape
    DR = R * D

    # ---- Sample-invariant work: computed once per parameter set. ----
    spat_flat, tw_flat = mditre_prepare(dist, kappa, mu, sigma, T, otu_k, time_k)

    # Tiny gate sigmoids on the host (removes two lane-dim-1 kernel outputs).
    z_flat = jax.nn.sigmoid(_flatten_dmajor(alpha) * bc_k)                 # (DR,)
    z_r = jax.nn.sigmoid(beta * bc_k)                                      # (R,)
    thr2_flat = _flatten_dmajor(thresh) ** 2                               # (DR,)
    det_slab = jnp.stack([thr2_flat, z_flat], axis=-1)                     # (DR, 2)
    rule_slab = jnp.concatenate([weight * z_r[None, :], bias[:, None]],
                                axis=1)                                    # (2, R+1)

    # Block-diagonal ones selector: folds the per-sample time sum into one MXU
    # matmul (sel[s*T + t, s] = 1).
    sel = jnp.repeat(jnp.eye(S, dtype=jnp.float32), T, axis=0)             # (S*T, S)

    # TODO(synk): avoid materializing this transpose at production sizes.
    x_jst = jnp.transpose(x, (1, 0, 2)).reshape(J, S * T)                  # (J, S*T)

    kernel = functools.partial(_apply_kernel, R=R, D=D, S=S, thresh_k=thresh_k)
    logits_cs = pl.pallas_call(
        kernel,
        out_shape=jax.ShapeDtypeStruct((2, S), jnp.float32),
    )(x_jst, spat_flat, tw_flat, sel, det_slab, rule_slab)

    # Map flat detector-major aux outputs back to the module's (R, D, ...) shapes.
    spat_w = spat_flat.reshape(D, R, J).transpose(1, 0, 2)
    time_w = tw_flat.reshape(D, R, T).transpose(1, 0, 2)
    z = z_flat.reshape(D, R).T
    return logits_cs.T, [spat_w, time_w, z, z_r]


def reference_forward(x, dist, kappa, mu, sigma, thresh, alpha, beta, weight, bias,
                      otu_k=1.0, time_k=1.0, thresh_k=1.0, bc_k=1.0):
    """Pure-JAX mirror of the torch eval-mode forward, for correctness checking."""
    T = x.shape[-1]
    unnorm = jax.nn.sigmoid(2.0 * otu_k * (kappa[..., None] ** 2 - dist))
    spat = unnorm / jnp.maximum(unnorm.sum(-1, keepdims=True), 1.0)
    agg = jnp.einsum('kij,sjt->skit', spat, x)
    times = jnp.arange(T, dtype=jnp.float32)
    dt = times[None, None, :] - mu[..., None]
    half = (sigma ** 2)[..., None] * 0.5
    twu = (jax.nn.sigmoid(2.0 * time_k * (dt + half))
           - jax.nn.sigmoid(2.0 * time_k * (dt - half)))
    tw = twu / jnp.maximum(twu.sum(-1, keepdims=True), 1.0)
    x_abun = (agg * tw[None]).sum(-1)
    x_above = jax.nn.sigmoid(2.0 * thresh_k * (x_abun - thresh ** 2))
    z = jax.nn.sigmoid(alpha * bc_k)
    resp = jnp.prod(1.0 - z[None] * (1.0 - x_above), axis=-1)
    z_r = jax.nn.sigmoid(beta * bc_k)
    out = resp @ (weight * z_r[None, :]).T + bias[None, :]
    return out, [spat, tw, z, z_r]


if __name__ == "__main__":
    # Small synthetic problem: 4 samples, 4 rules, 8 detectors, 16 OTUs, 8 time points.
    S, R, D, J, T = 4, 4, 8, 16, 8
    key = jax.random.PRNGKey(0)
    ks = jax.random.split(key, 10)

    x = jax.random.uniform(ks[0], (S, J, T), dtype=jnp.float32)            # abundances
    dist = jax.random.uniform(ks[1], (R, D, J), dtype=jnp.float32)         # phylo dists
    kappa = jax.random.uniform(ks[2], (R, D), jnp.float32, 0.3, 1.0)
    mu = jax.random.uniform(ks[3], (R, D), jnp.float32, 0.0, float(T))
    sigma = jax.random.uniform(ks[4], (R, D), jnp.float32, 1.0, 2.5)
    thresh = jax.random.uniform(ks[5], (R, D), jnp.float32, 0.0, 0.5)
    alpha = jax.random.normal(ks[6], (R, D), jnp.float32)
    beta = jax.random.normal(ks[7], (R,), jnp.float32)
    bound = (6.0 / R) ** 0.5                                               # kaiming uniform
    weight = jax.random.uniform(ks[8], (2, R), jnp.float32, -bound, bound)
    bias = jnp.zeros((2,), jnp.float32)

    args = (x, dist, kappa, mu, sigma, thresh, alpha, beta, weight, bias)
    out, (spat_w, time_w, z, z_r) = mditre_forward(*args)
    jax.block_until_ready(out)

    ref_out, (ref_spat, ref_tw, ref_z, ref_zr) = reference_forward(*args)
    assert jnp.allclose(out, ref_out, atol=1e-5, rtol=1e-5), "logits mismatch"
    assert jnp.allclose(spat_w, ref_spat, atol=1e-5, rtol=1e-5), "spat_wts mismatch"
    assert jnp.allclose(time_w, ref_tw, atol=1e-5, rtol=1e-5), "time_wts mismatch"
    assert jnp.allclose(z, ref_z, atol=1e-5, rtol=1e-5), "rule gate mismatch"
    assert jnp.allclose(z_r, ref_zr, atol=1e-5, rtol=1e-5), "dense gate mismatch"

    print("KERNEL_OK")
</pallas_src>

<mosaic_0001>
module attributes {stable_mosaic.version = 11 : i64} {
  func.func @_prepare_kernel(%arg0: memref<32x16xf32, #tpu.memory_space<vmem>>, %arg1: memref<32x3xf32, #tpu.memory_space<vmem>>, %arg2: memref<32x16xf32, #tpu.memory_space<vmem>>, %arg3: memref<32x8xf32, #tpu.memory_space<vmem>>) attributes {dimension_semantics = [], scalar_prefetch = 0 : i64, scratch_operands = 0 : i64, tpu.core_type = #tpu.core_type<tc>} {
    %c0 = arith.constant 0 : index
    %c0_0 = arith.constant 0 : index
    %0 = vector.load %arg1[%c0, %c0_0] : memref<32x3xf32, #tpu.memory_space<vmem>>, vector<32x1xf32>
    %1 = arith.mulf %0, %0 : vector<32x1xf32>
    %c0_1 = arith.constant 0 : index
    %c1 = arith.constant 1 : index
    %2 = vector.load %arg1[%c0_1, %c1] : memref<32x3xf32, #tpu.memory_space<vmem>>, vector<32x1xf32>
    %c0_2 = arith.constant 0 : index
    %c2 = arith.constant 2 : index
    %3 = vector.load %arg1[%c0_2, %c2] : memref<32x3xf32, #tpu.memory_space<vmem>>, vector<32x1xf32>
    %4 = arith.mulf %3, %3 : vector<32x1xf32>
    %cst = arith.constant 5.000000e-01 : f32
    %5 = vector.broadcast %cst : f32 to vector<32x1xf32>
    %6 = arith.mulf %4, %5 : vector<32x1xf32>
    %c0_3 = arith.constant 0 : index
    %c0_4 = arith.constant 0 : index
    %7 = vector.load %arg0[%c0_3, %c0_4] : memref<32x16xf32, #tpu.memory_space<vmem>>, vector<32x16xf32>
    %8 = vector.broadcast %1 : vector<32x1xf32> to vector<32x16xf32>
    %9 = arith.subf %8, %7 : vector<32x16xf32>
    %cst_5 = arith.constant 2.000000e+00 : f32
    %10 = vector.broadcast %cst_5 : f32 to vector<32x16xf32>
    %11 = arith.mulf %10, %9 : vector<32x16xf32>
    %12 = arith.negf %11 : vector<32x16xf32>
    %13 = math.exp %12 : vector<32x16xf32>
    %cst_6 = arith.constant 1.000000e+00 : f32
    %14 = vector.broadcast %cst_6 : f32 to vector<32x16xf32>
    %15 = arith.addf %14, %13 : vector<32x16xf32>
    %16 = arith.divf %14, %15 : vector<32x16xf32>
    %cst_7 = arith.constant dense<0.000000e+00> : vector<32xf32>
    %17 = vector.multi_reduction <add>, %16, %cst_7 [1] : vector<32x16xf32> to vector<32xf32>
    %18 = vector.shape_cast %17 : vector<32xf32> to vector<32x1xf32>
    %cst_8 = arith.constant 1.000000e+00 : f32
    %19 = vector.broadcast %cst_8 : f32 to vector<32x1xf32>
    %20 = arith.maximumf %18, %19 : vector<32x1xf32>
    %21 = vector.broadcast %20 : vector<32x1xf32> to vector<32x16xf32>
    %22 = arith.divf %16, %21 : vector<32x16xf32>
    %c0_9 = arith.constant 0 : index
    %c0_10 = arith.constant 0 : index
    %23 = vector.load %arg2[%c0_9, %c0_10] : memref<32x16xf32, #tpu.memory_space<vmem>>, vector<32x16xf32>
    tpu.vector_store %arg2[%c0_9, %c0_10], %22 {strides = array<i32>} : memref<32x16xf32, #tpu.memory_space<vmem>>, vector<32x16xf32>,
    %24 = tpu.iota {dimensions = array<i32: 1>} : vector<32x8xi32>
    %25 = arith.sitofp %24 : vector<32x8xi32> to vector<32x8xf32>
    %26 = vector.broadcast %2 : vector<32x1xf32> to vector<32x8xf32>
    %27 = arith.subf %25, %26 : vector<32x8xf32>
    %28 = vector.broadcast %6 : vector<32x1xf32> to vector<32x8xf32>
    %29 = arith.addf %27, %28 : vector<32x8xf32>
    %cst_11 = arith.constant 2.000000e+00 : f32
    %30 = vector.broadcast %cst_11 : f32 to vector<32x8xf32>
    %31 = arith.mulf %30, %29 : vector<32x8xf32>
    %32 = arith.negf %31 : vector<32x8xf32>
    %33 = math.exp %32 : vector<32x8xf32>
    %cst_12 = arith.constant 1.000000e+00 : f32
    %34 = vector.broadcast %cst_12 : f32 to vector<32x8xf32>
    %35 = arith.addf %34, %33 : vector<32x8xf32>
    %36 = arith.divf %34, %35 : vector<32x8xf32>
    %37 = vector.broadcast %6 : vector<32x1xf32> to vector<32x8xf32>
    %38 = arith.subf %27, %37 : vector<32x8xf32>
    %cst_13 = arith.constant 2.000000e+00 : f32
    %39 = vector.broadcast %cst_13 : f32 to vector<32x8xf32>
    %40 = arith.mulf %39, %38 : vector<32x8xf32>
    %41 = arith.negf %40 : vector<32x8xf32>
    %42 = math.exp %41 : vector<32x8xf32>
    %cst_14 = arith.constant 1.000000e+00 : f32
    %43 = vector.broadcast %cst_14 : f32 to vector<32x8xf32>
    %44 = arith.addf %43, %42 : vector<32x8xf32>
    %45 = arith.divf %43, %44 : vector<32x8xf32>
    %46 = arith.subf %36, %45 : vector<32x8xf32>
    %cst_15 = arith.constant dense<0.000000e+00> : vector<32xf32>
    %47 = vector.multi_reduction <add>, %46, %cst_15 [1] : vector<32x8xf32> to vector<32xf32>
    %48 = vector.shape_cast %47 : vector<32xf32> to vector<32x1xf32>
    %cst_16 = arith.constant 1.000000e+00 : f32
    %49 = vector.broadcast %cst_16 : f32 to vector<32x1xf32>
    %50 = arith.maximumf %48, %49 : vector<32x1xf32>
    %51 = vector.broadcast %50 : vector<32x1xf32> to vector<32x8xf32>
    %52 = arith.divf %46, %51 : vector<32x8xf32>
    %c0_17 = arith.constant 0 : index
    %c0_18 = arith.constant 0 : index
    %53 = vector.load %arg3[%c0_17, %c0_18] : memref<32x8xf32, #tpu.memory_space<vmem>>, vector<32x8xf32>
    tpu.vector_store %arg3[%c0_17, %c0_18], %52 {strides = array<i32>} : memref<32x8xf32, #tpu.memory_space<vmem>>, vector<32x8xf32>,
    return
  }
}

</mosaic_0001>

<llo_original>
// kernel: tpu_custom_call.1
$region0: #{tpu_custom_call.1}
  #allocation0 [shape = 'u32[]', space=smem, size = 0x4, offset = 0x4, fixed_abs, tag = 'smem constant byte address 0x4 - core index']
  #allocation1 [shape = 'u32[144,128]{1,0:T(1,128)}', space=vmem, size = 0x12000, scoped, tag = 'internal scratch']
  %s0 = inlined_call_operand.vmem [shape: f32[32,16], index: 0, kind: input, shape index: {}]
  %s1 = inlined_call_operand.vmem [shape: f32[32,3], index: 1, kind: input, shape index: {}]
  %s2 = inlined_call_operand.vmem [shape: f32[32,16], index: 2, kind: output, shape index: {0}]
  %s3 = inlined_call_operand.vmem [shape: f32[32,8], index: 3, kind: output, shape index: {1}]
  %4 = xla_tuple %s2, %s3
  %s5 = sld [smem:[#allocation0]]
  $region26: #{tpu_custom_call.1} parent=0
    _
  %s7 = ssub.s32 1, %s5
  %s8 = scalar_select 0, %s7, %s5
  // Predicated region
  $region2: #{tpu_custom_call.1} parent=0 // pred_check
    _
  $region3: #{tpu_custom_call.1} parent=0 // pred_check_branch
    %10 = sbr.rel (0) target = $region5
  $region4: #{tpu_custom_call.1} parent=0 // pred_region
    _
  $region5: #{tpu_custom_call.1} parent=0 // pred_fallthru
    _
  // Predicated region
  $region6: #{tpu_custom_call.1} parent=0 // pred_check
    _
  $region7: #{tpu_custom_call.1} parent=0 // pred_check_branch
    %12 = sbr.rel (0) target = $region9
  $region8: #{tpu_custom_call.1} parent=0 // pred_region
    _
  $region9: #{tpu_custom_call.1} parent=0 // pred_fallthru
    _
  %v13 = vld [vmem:[%s1] sm:$0xff]
  %v14 = vld [vmem:[%s1 + $0x8] sm:$0xff]
  %v15 = vld [vmem:[%s1 + $0x10] sm:$0xff]
  %v16 = vld [vmem:[%s1 + $0x18] sm:$0xff]
  %v17 = vmul.f32 %v13, %v13
  %v18 = vmul.f32 %v14, %v14
  %v19 = vmul.f32 %v15, %v15
  %v20 = vmul.f32 %v16, %v16
  %v21 = vmul.f32 %v17, 0.5
  %v22 = vmul.f32 %v18, 0.5
  %v23 = vmul.f32 %v19, 0.5
  %v24 = vmul.f32 %v20, 0.5
  %v25 = vld [vmem:[%s0] sm:$0xff]
  %v26 = vld [vmem:[%s0 + $0x8] sm:$0xff]
  %v27 = vld [vmem:[%s0 + $0x10] sm:$0xff]
  %v28 = vld [vmem:[%s0 + $0x18] sm:$0xff]
  %30 = vset.pattern.permute.xlu0 0
  %31 = vperm.xlu0 %30, %v17
  %v32 = vpop.permute.xlu0 %31
  %35 = vset.pattern.permute.xlu0 0
  %36 = vperm.xlu0 %35, %v18
  %v37 = vpop.permute.xlu0 %36
  %40 = vset.pattern.permute.xlu0 0
  %41 = vperm.xlu0 %40, %v19
  %v42 = vpop.permute.xlu0 %41
  %45 = vset.pattern.permute.xlu0 0
  %46 = vperm.xlu0 %45, %v20
  %v47 = vpop.permute.xlu0 %46
  %v49 = vsub.f32 %v32, %v25
  %v50 = vsub.f32 %v37, %v26
  %v51 = vsub.f32 %v42, %v27
  %v52 = vsub.f32 %v47, %v28
  %v53 = vmul.f32 %v49, 2.0
  %v54 = vmul.f32 %v50, 2.0
  %v55 = vmul.f32 %v51, 2.0
  %v56 = vmul.f32 %v52, 2.0
  %v57 = vxor.u32 %v53, 2147483648
  %v58 = vxor.u32 %v54, 2147483648
  %v59 = vxor.u32 %v55, 2147483648
  %v60 = vxor.u32 %v56, 2147483648
  %v61 = vmul.f32 %v57, 1.442695
  %v62 = vpow.pop %v61
  %v63 = vmul.f32 %v58, 1.442695
  %v64 = vpow.pop %v63
  %v65 = vmul.f32 %v59, 1.442695
  %v66 = vpow.pop %v65
  %v67 = vmul.f32 %v60, 1.442695
  %v68 = vpow.pop %v67
  %v69 = vadd.f32 %v62, 1.0
  %v70 = vadd.f32 %v64, 1.0
  %v71 = vadd.f32 %v66, 1.0
  %v72 = vadd.f32 %v68, 1.0
  %v73 = vrcp.pop %v69
  %v74 = vmul.f32 1.0, %v73
  %v75 = vrcp.pop %v70
  %v76 = vmul.f32 1.0, %v75
  %v77 = vrcp.pop %v71
  %v78 = vmul.f32 1.0, %v77
  %v79 = vrcp.pop %v72
  %v80 = vmul.f32 1.0, %v79
  %vm81 = vcmask 130048
  %v82 = vsel %vm81, %v74, 0.0
  %83 = vadd.xlane.f32.xlu0 %v82
  %v84 = vpop.xlane.xlu0 %83
  %v85 = vsel %vm81, %v76, 0.0
  %86 = vadd.xlane.f32.xlu0 %v85
  %v87 = vpop.xlane.xlu0 %86
  %v88 = vsel %vm81, %v78, 0.0
  %89 = vadd.xlane.f32.xlu0 %v88
  %v90 = vpop.xlane.xlu0 %89
  %v91 = vsel %vm81, %v80, 0.0
  %92 = vadd.xlane.f32.xlu0 %v91
  %v93 = vpop.xlane.xlu0 %92
  %v94 = vmax.f32 %v84, 1.0
  %v95 = vmax.f32 %v87, 1.0
  %v96 = vmax.f32 %v90, 1.0
  %v97 = vmax.f32 %v93, 1.0
  %v98 = vrcp.pop %v94
  %v99 = vmul.f32 %v74, %v98
  %v100 = vrcp.pop %v95
  %v101 = vmul.f32 %v76, %v100
  %v102 = vrcp.pop %v96
  %v103 = vmul.f32 %v78, %v102
  %v104 = vrcp.pop %v97
  %v105 = vmul.f32 %v80, %v104
  %106 = vst.msk [vmem:[%s2] sm:$0xff] %vm81, %v99
  %107 = vst.msk [vmem:[%s2 + $0x8] sm:$0xff] %vm81, %v101
  %108 = vst.msk [vmem:[%s2 + $0x10] sm:$0xff] %vm81, %v103
  %109 = vst.msk [vmem:[%s2 + $0x18] sm:$0xff] %vm81, %v105
  %v110 = vlaneseq
  %v111 = vand.u32 %v110, 127
  %v112 = vcvt.s32.f32 %v111
  %114 = vset.pattern.permute.xlu0 1
  %115 = vperm.xlu0 %114, %v13
  %v116 = vpop.permute.xlu0 %115
  %119 = vset.pattern.permute.xlu0 1
  %120 = vperm.xlu0 %119, %v14
  %v121 = vpop.permute.xlu0 %120
  %124 = vset.pattern.permute.xlu0 1
  %125 = vperm.xlu0 %124, %v15
  %v126 = vpop.permute.xlu0 %125
  %129 = vset.pattern.permute.xlu0 1
  %130 = vperm.xlu0 %129, %v16
  %v131 = vpop.permute.xlu0 %130
  %v133 = vsub.f32 %v112, %v116
  %v134 = vsub.f32 %v112, %v121
  %v135 = vsub.f32 %v112, %v126
  %v136 = vsub.f32 %v112, %v131
  %138 = vset.pattern.permute.xlu0 2
  %139 = vperm.xlu0 %138, %v21
  %v140 = vpop.permute.xlu0 %139
  %143 = vset.pattern.permute.xlu0 2
  %144 = vperm.xlu0 %143, %v22
  %v145 = vpop.permute.xlu0 %144
  %148 = vset.pattern.permute.xlu0 2
  %149 = vperm.xlu0 %148, %v23
  %v150 = vpop.permute.xlu0 %149
  %153 = vset.pattern.permute.xlu0 2
  %154 = vperm.xlu0 %153, %v24
  %v155 = vpop.permute.xlu0 %154
  %v157 = vadd.f32 %v133, %v140
  %v158 = vadd.f32 %v134, %v145
  %v159 = vadd.f32 %v135, %v150
  %v160 = vadd.f32 %v136, %v155
  %v161 = vmul.f32 %v157, 2.0
  %v162 = vmul.f32 %v158, 2.0
  %v163 = vmul.f32 %v159, 2.0
  %v164 = vmul.f32 %v160, 2.0
  %v165 = vxor.u32 %v161, 2147483648
  %v166 = vxor.u32 %v162, 2147483648
  %v167 = vxor.u32 %v163, 2147483648
  %v168 = vxor.u32 %v164, 2147483648
  %v169 = vmul.f32 %v165, 1.442695
  %v170 = vpow.pop %v169
  %v171 = vmul.f32 %v166, 1.442695
  %v172 = vpow.pop %v171
  %v173 = vmul.f32 %v167, 1.442695
  %v174 = vpow.pop %v173
  %v175 = vmul.f32 %v168, 1.442695
  %v176 = vpow.pop %v175
  %v177 = vadd.f32 %v170, 1.0
  %v178 = vadd.f32 %v172, 1.0
  %v179 = vadd.f32 %v174, 1.0
  %v180 = vadd.f32 %v176, 1.0
  %v181 = vrcp.pop %v177
  %v182 = vmul.f32 1.0, %v181
  %v183 = vrcp.pop %v178
  %v184 = vmul.f32 1.0, %v183
  %v185 = vrcp.pop %v179
  %v186 = vmul.f32 1.0, %v185
  %v187 = vrcp.pop %v180
  %v188 = vmul.f32 1.0, %v187
  %v189 = vsub.f32 %v133, %v140
  %v190 = vsub.f32 %v134, %v145
  %v191 = vsub.f32 %v135, %v150
  %v192 = vsub.f32 %v136, %v155
  %v193 = vmul.f32 %v189, 2.0
  %v194 = vmul.f32 %v190, 2.0
  %v195 = vmul.f32 %v191, 2.0
  %v196 = vmul.f32 %v192, 2.0
  %v197 = vxor.u32 %v193, 2147483648
  %v198 = vxor.u32 %v194, 2147483648
  %v199 = vxor.u32 %v195, 2147483648
  %v200 = vxor.u32 %v196, 2147483648
  %v201 = vmul.f32 %v197, 1.442695
  %v202 = vpow.pop %v201
  %v203 = vmul.f32 %v198, 1.442695
  %v204 = vpow.pop %v203
  %v205 = vmul.f32 %v199, 1.442695
  %v206 = vpow.pop %v205
  %v207 = vmul.f32 %v200, 1.442695
  %v208 = vpow.pop %v207
  %v209 = vadd.f32 %v202, 1.0
  %v210 = vadd.f32 %v204, 1.0
  %v211 = vadd.f32 %v206, 1.0
  %v212 = vadd.f32 %v208, 1.0
  %v213 = vrcp.pop %v209
  %v214 = vmul.f32 1.0, %v213
  %v215 = vrcp.pop %v210
  %v216 = vmul.f32 1.0, %v215
  %v217 = vrcp.pop %v211
  %v218 = vmul.f32 1.0, %v217
  %v219 = vrcp.pop %v212
  %v220 = vmul.f32 1.0, %v219
  %v221 = vsub.f32 %v182, %v214
  %v222 = vsub.f32 %v184, %v216
  %v223 = vsub.f32 %v186, %v218
  %v224 = vsub.f32 %v188, %v220
  %vm225 = vcmask 64512
  %v226 = vsel %vm225, %v221, 0.0
  %227 = vadd.xlane.f32.xlu0 %v226
  %v228 = vpop.xlane.xlu0 %227
  %v229 = vsel %vm225, %v222, 0.0
  %230 = vadd.xlane.f32.xlu0 %v229
  %v231 = vpop.xlane.xlu0 %230
  %v232 = vsel %vm225, %v223, 0.0
  %233 = vadd.xlane.f32.xlu0 %v232
  %v234 = vpop.xlane.xlu0 %233
  %v235 = vsel %vm225, %v224, 0.0
  %236 = vadd.xlane.f32.xlu0 %v235
  %v237 = vpop.xlane.xlu0 %236
  %v238 = vmax.f32 %v228, 1.0
  %v239 = vmax.f32 %v231, 1.0
  %v240 = vmax.f32 %v234, 1.0
  %v241 = vmax.f32 %v237, 1.0
  %v242 = vrcp.pop %v238
  %v243 = vmul.f32 %v221, %v242
  %v244 = vrcp.pop %v239
  %v245 = vmul.f32 %v222, %v244
  %v246 = vrcp.pop %v240
  %v247 = vmul.f32 %v223, %v246
  %v248 = vrcp.pop %v241
  %v249 = vmul.f32 %v224, %v248
  %250 = vst.msk [vmem:[%s3] sm:$0xff] %vm225, %v243
  %251 = vst.msk [vmem:[%s3 + $0x8] sm:$0xff] %vm225, %v245
  %252 = vst.msk [vmem:[%s3 + $0x10] sm:$0xff] %vm225, %v247
  %253 = vst.msk [vmem:[%s3 + $0x18] sm:$0xff] %vm225, %v249
  // Predicated region
  $region10: #{tpu_custom_call.1} parent=0 // pred_check
    _
  $region11: #{tpu_custom_call.1} parent=0 // pred_check_branch
    %255 = sbr.rel (0) target = $region13
  $region12: #{tpu_custom_call.1} parent=0 // pred_region
    _
  $region13: #{tpu_custom_call.1} parent=0 // pred_fallthru
    _
  // Predicated region
  $region14: #{tpu_custom_call.1} parent=0 // pred_check
    _
  $region15: #{tpu_custom_call.1} parent=0 // pred_check_branch
    %257 = sbr.rel (0) target = $region17
  $region16: #{tpu_custom_call.1} parent=0 // pred_region
    _
  $region17: #{tpu_custom_call.1} parent=0 // pred_fallthru
    _
  // Predicated region
  $region18: #{tpu_custom_call.1} parent=0 // pred_check
    _
  $region19: #{tpu_custom_call.1} parent=0 // pred_check_branch
    %259 = sbr.rel (0) target = $region21
  $region20: #{tpu_custom_call.1} parent=0 // pred_region
    _
  $region21: #{tpu_custom_call.1} parent=0 // pred_fallthru
    _
  // Predicated region
  $region22: #{tpu_custom_call.1} parent=0 // pred_check
    _
  $region23: #{tpu_custom_call.1} parent=0 // pred_check_branch
    %261 = sbr.rel (0) target = $region25
  $region24: #{tpu_custom_call.1} parent=0 // pred_region
    _
  $region25: #{tpu_custom_call.1} parent=0 // pred_fallthru
    _

</llo_original>
